<compile_context>
chip_gen: v5e
topology: v5e:2x2
jax: 0.10.0
libtpu: 0.0.40
codegen_flags: <defaults>
</compile_context>

<pallas_src>
import functools

import jax
import jax.numpy as jnp
from jax.experimental import pallas as pl
from jax.experimental.pallas import tpu as pltpu

EPS = 1e-5            # PyTorch GroupNorm default eps
NUM_GROUPS = 2        # BasicBlock uses norm_layer(2, planes)
SAMPLES_PER_STEP = 2  # BTILE: even so (BTILE*C, HW) fills all 8 f32 sublanes
MXU_DTYPE = jnp.float32  # bf16 on v6e/v7x at real sizes (re-check tolerance if changed)


def _gn_relu(h, gamma, beta, gmix):
    """GroupNorm + affine + ReLU on a (S*C, HW) slab, no reshapes.

    gmix is the (S*C, S*C) within-(sample,group) channel-averaging matrix, so the
    group reduction is a lane-dense matmul + lane reduction.  Two-pass variance.
    """
    inv_hw = 1.0 / h.shape[1]
    gm = jnp.dot(gmix, h, preferred_element_type=jnp.float32)       # per-position group mean
    mean = jnp.sum(gm, axis=1, keepdims=True) * inv_hw              # (S*C, 1) group mean
    d = h - mean
    gv = jnp.dot(gmix, d * d, preferred_element_type=jnp.float32)
    var = jnp.sum(gv, axis=1, keepdims=True) * inv_hw               # biased variance
    r = jax.lax.rsqrt(var + EPS)
    return jnp.maximum(d * r * gamma + beta, 0.0)


def _conv3x3(h, wbig, masks, shifts):
    """3x3 conv (stride 1, pad 1, no bias) on a batched slab as ONE matmul.

    h:     (S*C, HW)  activation slab (row = s*C + c, spatial flattened on lanes).
    wbig:  (S*C, 9*S*C) block-diagonal-over-samples im2col weights (resident).
    masks: (9, HW) 0/1 boundary-validity masks (precomputed in the wrapper).
    The 9 taps are XLU lane rotations; the patch stays in registers (no VMEM round trip).
    """
    taps = []
    for t, sh in enumerate(shifts):
        if sh == 0:                      # center tap: no shift, mask is all ones
            taps.append(h)
        else:
            taps.append(pltpu.roll(h, sh, 1) * masks[t:t + 1, :])
    patch = jnp.concatenate(taps, axis=0)                            # (9*S*C, HW) in-register
    return jnp.dot(wbig.astype(MXU_DTYPE), patch.astype(MXU_DTYPE),
                   preferred_element_type=jnp.float32)


def _basic_block_kernel(x_ref, prm_ref, w1_ref, w2_ref, mask_ref, gmix_ref,
                        out_ref, *, shifts):
    x = x_ref[...].astype(jnp.float32)            # (S*C, HW) lane-dense, 8 full sublanes
    prm = prm_ref[...].astype(jnp.float32)        # (S*C, 4): columns [g1, b1, g2, b2]
    g1, b1, g2, b2 = prm[:, 0:1], prm[:, 1:2], prm[:, 2:3], prm[:, 3:4]
    masks = mask_ref[...]
    gmix = gmix_ref[...]

    h1 = _gn_relu(x, g1, b1, gmix)                 # bn1 (GroupNorm) + relu
    y1 = _conv3x3(h1, w1_ref[...], masks, shifts)  # conv1
    h2 = _gn_relu(y1, g2, b2, gmix)                # bn2 + relu
    y2 = _conv3x3(h2, w2_ref[...], masks, shifts)  # conv2
    out_ref[...] = (y2 + x).astype(out_ref.dtype)  # residual (identity shortcut)


def _pack_conv_weights(w_hwio, samples):
    """(3,3,Cin,Cout) HWIO -> (S*Cout, 9*S*Cin) block-diagonal-over-samples matrix.

    Column order (t, s, ci) matches the tap-major, sample-major-rows im2col patch.
    """
    _, _, cin, cout = w_hwio.shape
    w9 = w_hwio.reshape(9, cin, cout)                     # [t, ci, co], t = kh*3 + kw
    wmix = jnp.transpose(w9, (2, 0, 1))                   # (co, t, ci)
    eye = jnp.eye(samples, dtype=wmix.dtype)
    wbig = jnp.einsum('ab,otc->aotbc', eye, wmix)         # (s, co, t, s', ci)
    return wbig.reshape(samples * cout, 9 * samples * cin)


def _tap_shifts_and_masks(H, W):
    """Static lane-roll amounts + (9, HW) 0/1 boundary-validity masks (output coords)."""
    HW = H * W
    col = jnp.arange(HW, dtype=jnp.int32)
    hi, wi = col // W, col % W
    shifts, rows = [], []
    for dh in (-1, 0, 1):
        for dw in (-1, 0, 1):
            shifts.append(int((-(dh * W + dw)) % HW))      # rolled[j] = h[j + dh*W + dw]
            ok = (hi + dh >= 0) & (hi + dh < H) & (wi + dw >= 0) & (wi + dw < W)
            rows.append(ok)
    return tuple(shifts), jnp.stack(rows).astype(jnp.float32)


@jax.jit
def basic_block(x_nchw, g1, b1, w1, g2, b2, w2):
    B, C, H, W = x_nchw.shape
    HW = H * W
    S = SAMPLES_PER_STEP
    SC = S * C
    Cg = C // NUM_GROUPS
    assert B % S == 0 and SC % 8 == 0, "this tiling needs B even and BTILE*C % 8 == 0"

    x2 = x_nchw.reshape(B * C, HW)                        # free, contiguous reshape

    shifts, masks = _tap_shifts_and_masks(H, W)
    w1m = _pack_conv_weights(w1.astype(jnp.float32), S)
    w2m = _pack_conv_weights(w2.astype(jnp.float32), S)

    # All four GN affine vectors merged into one resident (S*C, 4) buffer.
    tile = lambda v: jnp.tile(v.astype(jnp.float32), (S,)).reshape(SC, 1)
    prm = jnp.concatenate([tile(g1), tile(b1), tile(g2), tile(b2)], axis=1)

    # Within-(sample, group) channel-averaging matrix for GroupNorm reductions.
    ridx = jnp.arange(SC)
    gmix = jnp.where((ridx[:, None] // Cg) == (ridx[None, :] // Cg),
                     1.0 / Cg, 0.0).astype(jnp.float32)

    kern = functools.partial(_basic_block_kernel, shifts=shifts)
    const = lambda shape: pl.BlockSpec(shape, lambda i: (0, 0))

    out = pl.pallas_call(
        kern,
        out_shape=jax.ShapeDtypeStruct((B * C, HW), x_nchw.dtype),
        grid_spec=pltpu.PrefetchScalarGridSpec(
            num_scalar_prefetch=0,
            grid=(B // S,),                                # >= 2 steps, parallel for v7x's 2 TCs
            in_specs=[
                pl.BlockSpec((SC, HW), lambda i: (i, 0)),  # x slab (lane-dense)
                const((SC, 4)),                            # merged GN affines (resident)
                const((SC, 9 * SC)),                       # conv1 weights (resident)
                const((SC, 9 * SC)),                       # conv2 weights (resident)
                const((9, HW)),                            # boundary masks (resident)
                const((SC, SC)),                           # GN group-mix matrix (resident)
            ],
            out_specs=pl.BlockSpec((SC, HW), lambda i: (i, 0)),
        ),
        compiler_params=pltpu.CompilerParams(
            dimension_semantics=("parallel",)),
    )(x2, prm, w1m, w2m, masks, gmix)
    return out.reshape(B, C, H, W)


def _reference(x_nchw, g1, b1, w1, g2, b2, w2):
    """Pure-JAX reference (full-precision convs) for the correctness check."""
    def gn_relu(x_nhwc, gamma, beta):
        Bb, Hh, Ww, Cc = x_nhwc.shape
        xg = x_nhwc.reshape(Bb, Hh, Ww, NUM_GROUPS, Cc // NUM_GROUPS)
        m = jnp.mean(xg, axis=(1, 2, 4), keepdims=True)
        v = jnp.mean((xg - m) ** 2, axis=(1, 2, 4), keepdims=True)
        xn = ((xg - m) * jax.lax.rsqrt(v + EPS)).reshape(Bb, Hh, Ww, Cc)
        return jnp.maximum(xn * gamma.reshape(1, 1, 1, Cc) + beta.reshape(1, 1, 1, Cc), 0.0)

    def conv(x_nhwc, w_hwio):
        return jax.lax.conv_general_dilated(
            x_nhwc, w_hwio, window_strides=(1, 1), padding="SAME",
            dimension_numbers=("NHWC", "HWIO", "NHWC"),
            precision=jax.lax.Precision.HIGHEST)

    x = jnp.transpose(x_nchw, (0, 2, 3, 1))
    y = conv(gn_relu(x, g1, b1), w1)
    y = conv(gn_relu(y, g2, b2), w2)
    return jnp.transpose(y + x, (0, 3, 1, 2))


if __name__ == "__main__":
    B, C, H, W = 4, 4, 16, 16          # inplanes = planes = 4, stride = 1
    key = jax.random.PRNGKey(0)
    kx, kw1, kw2, kg1, kb1, kg2, kb2 = jax.random.split(key, 7)

    x = jax.random.normal(kx, (B, C, H, W), jnp.float32)
    w1 = jax.random.normal(kw1, (3, 3, C, C), jnp.float32) * 0.1   # HWIO
    w2 = jax.random.normal(kw2, (3, 3, C, C), jnp.float32) * 0.1   # HWIO
    g1 = 1.0 + 0.1 * jax.random.normal(kg1, (C,), jnp.float32)
    b1 = 0.1 * jax.random.normal(kb1, (C,), jnp.float32)
    g2 = 1.0 + 0.1 * jax.random.normal(kg2, (C,), jnp.float32)
    b2 = 0.1 * jax.random.normal(kb2, (C,), jnp.float32)

    out = basic_block(x, g1, b1, w1, g2, b2, w2)
    jax.block_until_ready(out)

    ref = _reference(x, g1, b1, w1, g2, b2, w2)
    assert out.shape == (B, C, H, W)
    err = jnp.max(jnp.abs(out - ref))
    assert jnp.allclose(out, ref, rtol=1e-3, atol=1e-3), (
        f"mismatch vs reference, max abs err = {err}")

    print("KERNEL_OK")
</pallas_src>

<mosaic_0001>
module attributes {stable_mosaic.version = 11 : i64} {
  func.func @_basic_block_kernel(%arg0: i32, %arg1: memref<8x256xf32, #tpu.memory_space<vmem>>, %arg2: memref<8x4xf32, #tpu.memory_space<vmem>>, %arg3: memref<8x72xf32, #tpu.memory_space<vmem>>, %arg4: memref<8x72xf32, #tpu.memory_space<vmem>>, %arg5: memref<9x256xf32, #tpu.memory_space<vmem>>, %arg6: memref<8x8xf32, #tpu.memory_space<vmem>>, %arg7: memref<8x256xf32, #tpu.memory_space<vmem>>) attributes {dimension_semantics = [#tpu.dimension_semantics<parallel>], iteration_bounds = array<i64: 2>, scalar_prefetch = 0 : i64, scratch_operands = 0 : i64, tpu.core_type = #tpu.core_type<tc>, window_params = [{transform_indices = @transform_0, window_bounds = array<i64: 8, 256>}, {pipeline_mode = #tpu.pipeline_mode<synchronous>, transform_indices = @transform_1, window_bounds = array<i64: 8, 4>}, {pipeline_mode = #tpu.pipeline_mode<synchronous>, transform_indices = @transform_2, window_bounds = array<i64: 8, 72>}, {pipeline_mode = #tpu.pipeline_mode<synchronous>, transform_indices = @transform_3, window_bounds = array<i64: 8, 72>}, {pipeline_mode = #tpu.pipeline_mode<synchronous>, transform_indices = @transform_4, window_bounds = array<i64: 9, 256>}, {pipeline_mode = #tpu.pipeline_mode<synchronous>, transform_indices = @transform_5, window_bounds = array<i64: 8, 8>}, {transform_indices = @transform_6, window_bounds = array<i64: 8, 256>}]} {
    %c0 = arith.constant 0 : index
    %c0_0 = arith.constant 0 : index
    %0 = vector.load %arg1[%c0, %c0_0] : memref<8x256xf32, #tpu.memory_space<vmem>>, vector<8x256xf32>
    %c0_1 = arith.constant 0 : index
    %c0_2 = arith.constant 0 : index
    %1 = vector.load %arg2[%c0_1, %c0_2] : memref<8x4xf32, #tpu.memory_space<vmem>>, vector<8x4xf32>
    %2 = vector.extract_strided_slice %1 {offsets = [0, 0], sizes = [8, 1], strides = [1, 1]} : vector<8x4xf32> to vector<8x1xf32>
    %3 = vector.extract_strided_slice %1 {offsets = [0, 1], sizes = [8, 1], strides = [1, 1]} : vector<8x4xf32> to vector<8x1xf32>
    %4 = vector.extract_strided_slice %1 {offsets = [0, 2], sizes = [8, 1], strides = [1, 1]} : vector<8x4xf32> to vector<8x1xf32>
    %5 = vector.extract_strided_slice %1 {offsets = [0, 3], sizes = [8, 1], strides = [1, 1]} : vector<8x4xf32> to vector<8x1xf32>
    %c0_3 = arith.constant 0 : index
    %c0_4 = arith.constant 0 : index
    %6 = vector.load %arg5[%c0_3, %c0_4] : memref<9x256xf32, #tpu.memory_space<vmem>>, vector<9x256xf32>
    %c0_5 = arith.constant 0 : index
    %c0_6 = arith.constant 0 : index
    %7 = vector.load %arg6[%c0_5, %c0_6] : memref<8x8xf32, #tpu.memory_space<vmem>>, vector<8x8xf32>
    %cst = arith.constant dense<0.000000e+00> : vector<8x256xf32>
    %8 = tpu.matmul %7, %0, %cst {dimension_numbers = #tpu.dot_dimension_numbers<[1], [0], [0], [1], [0, 0, 1, 1], [], []>} : vector<8x8xf32>, vector<8x256xf32>, vector<8x256xf32> -> vector<8x256xf32>
    %cst_7 = arith.constant dense<0.000000e+00> : vector<8xf32>
    %9 = vector.multi_reduction <add>, %8, %cst_7 [1] : vector<8x256xf32> to vector<8xf32>
    %10 = vector.shape_cast %9 : vector<8xf32> to vector<8x1xf32>
    %cst_8 = arith.constant 3.906250e-03 : f32
    %11 = vector.broadcast %cst_8 : f32 to vector<8x1xf32>
    %12 = arith.mulf %10, %11 : vector<8x1xf32>
    %13 = vector.broadcast %12 : vector<8x1xf32> to vector<8x256xf32>
    %14 = arith.subf %0, %13 : vector<8x256xf32>
    %15 = arith.mulf %14, %14 : vector<8x256xf32>
    %cst_9 = arith.constant dense<0.000000e+00> : vector<8x256xf32>
    %16 = tpu.matmul %7, %15, %cst_9 {dimension_numbers = #tpu.dot_dimension_numbers<[1], [0], [0], [1], [0, 0, 1, 1], [], []>} : vector<8x8xf32>, vector<8x256xf32>, vector<8x256xf32> -> vector<8x256xf32>
    %cst_10 = arith.constant dense<0.000000e+00> : vector<8xf32>
    %17 = vector.multi_reduction <add>, %16, %cst_10 [1] : vector<8x256xf32> to vector<8xf32>
    %18 = vector.shape_cast %17 : vector<8xf32> to vector<8x1xf32>
    %cst_11 = arith.constant 3.906250e-03 : f32
    %19 = vector.broadcast %cst_11 : f32 to vector<8x1xf32>
    %20 = arith.mulf %18, %19 : vector<8x1xf32>
    %cst_12 = arith.constant 9.99999974E-6 : f32
    %21 = vector.broadcast %cst_12 : f32 to vector<8x1xf32>
    %22 = arith.addf %20, %21 : vector<8x1xf32>
    %23 = math.rsqrt %22 : vector<8x1xf32>
    %24 = vector.broadcast %23 : vector<8x1xf32> to vector<8x256xf32>
    %25 = arith.mulf %14, %24 : vector<8x256xf32>
    %26 = vector.broadcast %2 : vector<8x1xf32> to vector<8x256xf32>
    %27 = arith.mulf %25, %26 : vector<8x256xf32>
    %28 = vector.broadcast %3 : vector<8x1xf32> to vector<8x256xf32>
    %29 = arith.addf %27, %28 : vector<8x256xf32>
    %cst_13 = arith.constant 0.000000e+00 : f32
    %30 = vector.broadcast %cst_13 : f32 to vector<8x256xf32>
    %31 = arith.maximumf %29, %30 : vector<8x256xf32>
    %c0_14 = arith.constant 0 : index
    %c0_15 = arith.constant 0 : index
    %32 = vector.load %arg3[%c0_14, %c0_15] : memref<8x72xf32, #tpu.memory_space<vmem>>, vector<8x72xf32>
    %c17_i32 = arith.constant 17 : i32
    %33 = tpu.dynamic_rotate %31 by %c17_i32 dim 1 : vector<8x256xf32>, i32 -> vector<8x256xf32>
    %34 = vector.extract_strided_slice %6 {offsets = [0, 0], sizes = [1, 256], strides = [1, 1]} : vector<9x256xf32> to vector<1x256xf32>
    %35 = vector.broadcast %34 : vector<1x256xf32> to vector<8x256xf32>
    %36 = arith.mulf %33, %35 : vector<8x256xf32>
    %c16_i32 = arith.constant 16 : i32
    %37 = tpu.dynamic_rotate %31 by %c16_i32 dim 1 : vector<8x256xf32>, i32 -> vector<8x256xf32>
    %38 = vector.extract_strided_slice %6 {offsets = [1, 0], sizes = [1, 256], strides = [1, 1]} : vector<9x256xf32> to vector<1x256xf32>
    %39 = vector.broadcast %38 : vector<1x256xf32> to vector<8x256xf32>
    %40 = arith.mulf %37, %39 : vector<8x256xf32>
    %c15_i32 = arith.constant 15 : i32
    %41 = tpu.dynamic_rotate %31 by %c15_i32 dim 1 : vector<8x256xf32>, i32 -> vector<8x256xf32>
    %42 = vector.extract_strided_slice %6 {offsets = [2, 0], sizes = [1, 256], strides = [1, 1]} : vector<9x256xf32> to vector<1x256xf32>
    %43 = vector.broadcast %42 : vector<1x256xf32> to vector<8x256xf32>
    %44 = arith.mulf %41, %43 : vector<8x256xf32>
    %c1_i32 = arith.constant 1 : i32
    %45 = tpu.dynamic_rotate %31 by %c1_i32 dim 1 : vector<8x256xf32>, i32 -> vector<8x256xf32>
    %46 = vector.extract_strided_slice %6 {offsets = [3, 0], sizes = [1, 256], strides = [1, 1]} : vector<9x256xf32> to vector<1x256xf32>
    %47 = vector.broadcast %46 : vector<1x256xf32> to vector<8x256xf32>
    %48 = arith.mulf %45, %47 : vector<8x256xf32>
    %c255_i32 = arith.constant 255 : i32
    %49 = tpu.dynamic_rotate %31 by %c255_i32 dim 1 : vector<8x256xf32>, i32 -> vector<8x256xf32>
    %50 = vector.extract_strided_slice %6 {offsets = [5, 0], sizes = [1, 256], strides = [1, 1]} : vector<9x256xf32> to vector<1x256xf32>
    %51 = vector.broadcast %50 : vector<1x256xf32> to vector<8x256xf32>
    %52 = arith.mulf %49, %51 : vector<8x256xf32>
    %c241_i32 = arith.constant 241 : i32
    %53 = tpu.dynamic_rotate %31 by %c241_i32 dim 1 : vector<8x256xf32>, i32 -> vector<8x256xf32>
    %54 = vector.extract_strided_slice %6 {offsets = [6, 0], sizes = [1, 256], strides = [1, 1]} : vector<9x256xf32> to vector<1x256xf32>
    %55 = vector.broadcast %54 : vector<1x256xf32> to vector<8x256xf32>
    %56 = arith.mulf %53, %55 : vector<8x256xf32>
    %c240_i32 = arith.constant 240 : i32
    %57 = tpu.dynamic_rotate %31 by %c240_i32 dim 1 : vector<8x256xf32>, i32 -> vector<8x256xf32>
    %58 = vector.extract_strided_slice %6 {offsets = [7, 0], sizes = [1, 256], strides = [1, 1]} : vector<9x256xf32> to vector<1x256xf32>
    %59 = vector.broadcast %58 : vector<1x256xf32> to vector<8x256xf32>
    %60 = arith.mulf %57, %59 : vector<8x256xf32>
    %c239_i32 = arith.constant 239 : i32
    %61 = tpu.dynamic_rotate %31 by %c239_i32 dim 1 : vector<8x256xf32>, i32 -> vector<8x256xf32>
    %62 = vector.extract_strided_slice %6 {offsets = [8, 0], sizes = [1, 256], strides = [1, 1]} : vector<9x256xf32> to vector<1x256xf32>
    %63 = vector.broadcast %62 : vector<1x256xf32> to vector<8x256xf32>
    %64 = arith.mulf %61, %63 : vector<8x256xf32>
    %65 = tpu.concatenate %36, %40, %44, %48, %31, %52, %56, %60, %64 in 0 : vector<8x256xf32>, vector<8x256xf32>, vector<8x256xf32>, vector<8x256xf32>, vector<8x256xf32>, vector<8x256xf32>, vector<8x256xf32>, vector<8x256xf32>, vector<8x256xf32> -> vector<72x256xf32>
    %cst_16 = arith.constant dense<0.000000e+00> : vector<8x256xf32>
    %66 = tpu.matmul %32, %65, %cst_16 {dimension_numbers = #tpu.dot_dimension_numbers<[1], [0], [0], [1], [0, 0, 1, 1], [], []>} : vector<8x72xf32>, vector<72x256xf32>, vector<8x256xf32> -> vector<8x256xf32>
    %cst_17 = arith.constant dense<0.000000e+00> : vector<8x256xf32>
    %67 = tpu.matmul %7, %66, %cst_17 {dimension_numbers = #tpu.dot_dimension_numbers<[1], [0], [0], [1], [0, 0, 1, 1], [], []>} : vector<8x8xf32>, vector<8x256xf32>, vector<8x256xf32> -> vector<8x256xf32>
    %cst_18 = arith.constant dense<0.000000e+00> : vector<8xf32>
    %68 = vector.multi_reduction <add>, %67, %cst_18 [1] : vector<8x256xf32> to vector<8xf32>
    %69 = vector.shape_cast %68 : vector<8xf32> to vector<8x1xf32>
    %cst_19 = arith.constant 3.906250e-03 : f32
    %70 = vector.broadcast %cst_19 : f32 to vector<8x1xf32>
    %71 = arith.mulf %69, %70 : vector<8x1xf32>
    %72 = vector.broadcast %71 : vector<8x1xf32> to vector<8x256xf32>
    %73 = arith.subf %66, %72 : vector<8x256xf32>
    %74 = arith.mulf %73, %73 : vector<8x256xf32>
    %cst_20 = arith.constant dense<0.000000e+00> : vector<8x256xf32>
    %75 = tpu.matmul %7, %74, %cst_20 {dimension_numbers = #tpu.dot_dimension_numbers<[1], [0], [0], [1], [0, 0, 1, 1], [], []>} : vector<8x8xf32>, vector<8x256xf32>, vector<8x256xf32> -> vector<8x256xf32>
    %cst_21 = arith.constant dense<0.000000e+00> : vector<8xf32>
    %76 = vector.multi_reduction <add>, %75, %cst_21 [1] : vector<8x256xf32> to vector<8xf32>
    %77 = vector.shape_cast %76 : vector<8xf32> to vector<8x1xf32>
    %cst_22 = arith.constant 3.906250e-03 : f32
    %78 = vector.broadcast %cst_22 : f32 to vector<8x1xf32>
    %79 = arith.mulf %77, %78 : vector<8x1xf32>
    %cst_23 = arith.constant 9.99999974E-6 : f32
    %80 = vector.broadcast %cst_23 : f32 to vector<8x1xf32>
    %81 = arith.addf %79, %80 : vector<8x1xf32>
    %82 = math.rsqrt %81 : vector<8x1xf32>
    %83 = vector.broadcast %82 : vector<8x1xf32> to vector<8x256xf32>
    %84 = arith.mulf %73, %83 : vector<8x256xf32>
    %85 = vector.broadcast %4 : vector<8x1xf32> to vector<8x256xf32>
    %86 = arith.mulf %84, %85 : vector<8x256xf32>
    %87 = vector.broadcast %5 : vector<8x1xf32> to vector<8x256xf32>
    %88 = arith.addf %86, %87 : vector<8x256xf32>
    %cst_24 = arith.constant 0.000000e+00 : f32
    %89 = vector.broadcast %cst_24 : f32 to vector<8x256xf32>
    %90 = arith.maximumf %88, %89 : vector<8x256xf32>
    %c0_25 = arith.constant 0 : index
    %c0_26 = arith.constant 0 : index
    %91 = vector.load %arg4[%c0_25, %c0_26] : memref<8x72xf32, #tpu.memory_space<vmem>>, vector<8x72xf32>
    %c17_i32_27 = arith.constant 17 : i32
    %92 = tpu.dynamic_rotate %90 by %c17_i32_27 dim 1 : vector<8x256xf32>, i32 -> vector<8x256xf32>
    %93 = vector.extract_strided_slice %6 {offsets = [0, 0], sizes = [1, 256], strides = [1, 1]} : vector<9x256xf32> to vector<1x256xf32>
    %94 = vector.broadcast %93 : vector<1x256xf32> to vector<8x256xf32>
    %95 = arith.mulf %92, %94 : vector<8x256xf32>
    %c16_i32_28 = arith.constant 16 : i32
    %96 = tpu.dynamic_rotate %90 by %c16_i32_28 dim 1 : vector<8x256xf32>, i32 -> vector<8x256xf32>
    %97 = vector.extract_strided_slice %6 {offsets = [1, 0], sizes = [1, 256], strides = [1, 1]} : vector<9x256xf32> to vector<1x256xf32>
    %98 = vector.broadcast %97 : vector<1x256xf32> to vector<8x256xf32>
    %99 = arith.mulf %96, %98 : vector<8x256xf32>
    %c15_i32_29 = arith.constant 15 : i32
    %100 = tpu.dynamic_rotate %90 by %c15_i32_29 dim 1 : vector<8x256xf32>, i32 -> vector<8x256xf32>
    %101 = vector.extract_strided_slice %6 {offsets = [2, 0], sizes = [1, 256], strides = [1, 1]} : vector<9x256xf32> to vector<1x256xf32>
    %102 = vector.broadcast %101 : vector<1x256xf32> to vector<8x256xf32>
    %103 = arith.mulf %100, %102 : vector<8x256xf32>
    %c1_i32_30 = arith.constant 1 : i32
    %104 = tpu.dynamic_rotate %90 by %c1_i32_30 dim 1 : vector<8x256xf32>, i32 -> vector<8x256xf32>
    %105 = vector.extract_strided_slice %6 {offsets = [3, 0], sizes = [1, 256], strides = [1, 1]} : vector<9x256xf32> to vector<1x256xf32>
    %106 = vector.broadcast %105 : vector<1x256xf32> to vector<8x256xf32>
    %107 = arith.mulf %104, %106 : vector<8x256xf32>
    %c255_i32_31 = arith.constant 255 : i32
    %108 = tpu.dynamic_rotate %90 by %c255_i32_31 dim 1 : vector<8x256xf32>, i32 -> vector<8x256xf32>
    %109 = vector.extract_strided_slice %6 {offsets = [5, 0], sizes = [1, 256], strides = [1, 1]} : vector<9x256xf32> to vector<1x256xf32>
    %110 = vector.broadcast %109 : vector<1x256xf32> to vector<8x256xf32>
    %111 = arith.mulf %108, %110 : vector<8x256xf32>
    %c241_i32_32 = arith.constant 241 : i32
    %112 = tpu.dynamic_rotate %90 by %c241_i32_32 dim 1 : vector<8x256xf32>, i32 -> vector<8x256xf32>
    %113 = vector.extract_strided_slice %6 {offsets = [6, 0], sizes = [1, 256], strides = [1, 1]} : vector<9x256xf32> to vector<1x256xf32>
    %114 = vector.broadcast %113 : vector<1x256xf32> to vector<8x256xf32>
    %115 = arith.mulf %112, %114 : vector<8x256xf32>
    %c240_i32_33 = arith.constant 240 : i32
    %116 = tpu.dynamic_rotate %90 by %c240_i32_33 dim 1 : vector<8x256xf32>, i32 -> vector<8x256xf32>
    %117 = vector.extract_strided_slice %6 {offsets = [7, 0], sizes = [1, 256], strides = [1, 1]} : vector<9x256xf32> to vector<1x256xf32>
    %118 = vector.broadcast %117 : vector<1x256xf32> to vector<8x256xf32>
    %119 = arith.mulf %116, %118 : vector<8x256xf32>
    %c239_i32_34 = arith.constant 239 : i32
    %120 = tpu.dynamic_rotate %90 by %c239_i32_34 dim 1 : vector<8x256xf32>, i32 -> vector<8x256xf32>
    %121 = vector.extract_strided_slice %6 {offsets = [8, 0], sizes = [1, 256], strides = [1, 1]} : vector<9x256xf32> to vector<1x256xf32>
    %122 = vector.broadcast %121 : vector<1x256xf32> to vector<8x256xf32>
    %123 = arith.mulf %120, %122 : vector<8x256xf32>
    %124 = tpu.concatenate %95, %99, %103, %107, %90, %111, %115, %119, %123 in 0 : vector<8x256xf32>, vector<8x256xf32>, vector<8x256xf32>, vector<8x256xf32>, vector<8x256xf32>, vector<8x256xf32>, vector<8x256xf32>, vector<8x256xf32>, vector<8x256xf32> -> vector<72x256xf32>
    %cst_35 = arith.constant dense<0.000000e+00> : vector<8x256xf32>
    %125 = tpu.matmul %91, %124, %cst_35 {dimension_numbers = #tpu.dot_dimension_numbers<[1], [0], [0], [1], [0, 0, 1, 1], [], []>} : vector<8x72xf32>, vector<72x256xf32>, vector<8x256xf32> -> vector<8x256xf32>
    %126 = arith.addf %125, %0 : vector<8x256xf32>
    %c0_36 = arith.constant 0 : index
    %c0_37 = arith.constant 0 : index
    %127 = vector.load %arg7[%c0_36, %c0_37] : memref<8x256xf32, #tpu.memory_space<vmem>>, vector<8x256xf32>
    tpu.vector_store %arg7[%c0_36, %c0_37], %126 {strides = array<i32>} : memref<8x256xf32, #tpu.memory_space<vmem>>, vector<8x256xf32>,
    return
  }
  func.func @transform_0(%arg0: i32) -> (i32, i32) {
    %c0_i32 = arith.constant 0 : i32
    %c0_i32_0 = arith.constant 0 : i32
    return %arg0, %c0_i32 : i32, i32
  }
  func.func @transform_1(%arg0: i32) -> (i32, i32) {
    %c0_i32 = arith.constant 0 : i32
    %c0_i32_0 = arith.constant 0 : i32
    %c0_i32_1 = arith.constant 0 : i32
    return %c0_i32, %c0_i32_0 : i32, i32
  }
  func.func @transform_2(%arg0: i32) -> (i32, i32) {
    %c0_i32 = arith.constant 0 : i32
    %c0_i32_0 = arith.constant 0 : i32
    %c0_i32_1 = arith.constant 0 : i32
    return %c0_i32, %c0_i32_0 : i32, i32
  }
  func.func @transform_3(%arg0: i32) -> (i32, i32) {
    %c0_i32 = arith.constant 0 : i32
    %c0_i32_0 = arith.constant 0 : i32
    %c0_i32_1 = arith.constant 0 : i32
    return %c0_i32, %c0_i32_0 : i32, i32
  }
  func.func @transform_4(%arg0: i32) -> (i32, i32) {
    %c0_i32 = arith.constant 0 : i32
    %c0_i32_0 = arith.constant 0 : i32
    %c0_i32_1 = arith.constant 0 : i32
    return %c0_i32, %c0_i32_0 : i32, i32
  }
  func.func @transform_5(%arg0: i32) -> (i32, i32) {
    %c0_i32 = arith.constant 0 : i32
    %c0_i32_0 = arith.constant 0 : i32
    %c0_i32_1 = arith.constant 0 : i32
    return %c0_i32, %c0_i32_0 : i32, i32
  }
  func.func @transform_6(%arg0: i32) -> (i32, i32) {
    %c0_i32 = arith.constant 0 : i32
    %c0_i32_0 = arith.constant 0 : i32
    return %arg0, %c0_i32 : i32, i32
  }
}

</mosaic_0001>

<llo_original>
// kernel: tile.23
$region0: #{tile.23}
  #allocation0 [shape = 's32[1]{0}', space=sflag, size = 0x4, scoped, tag = 'scoped memory for tile.23']
  %s0 = inlined_call_operand.vmem [shape: f32[4], index: 0, kind: input, shape index: {}]
  %s1 = inlined_call_operand.vmem [shape: f32[2,4], index: 1, kind: output, shape index: {}]
  // Predicated region
  $region2: #{tile.23} parent=0 // pred_check
    _
  $region3: #{tile.23} parent=0 // pred_check_branch
    %3 = sbr.rel (0) target = $region5
  $region4: #{tile.23} parent=0 // pred_region
    _
  $region5: #{tile.23} parent=0 // pred_fallthru
    _
  %v4 = vld [vmem:[%s0] ss:$0 sm:$0xff]
  %5 = vst [vmem:[%s1] sm:$0x3] %v4

// kernel: tile.0
$region0: #{tile.0}
  %s0 = inlined_call_operand.vmem [shape: f32[2,4], index: 0, kind: input, shape index: {}]
  %s1 = inlined_call_operand.vmem [shape: f32[8,1], index: 1, kind: output, shape index: {}]
  $region1: #{tile.0} parent=0
    #allocation0 [shape = 'u8[4096]{0}', space=vmem, size = 0x1000, scoped, tag = 'scoped mem for input reshape']
    %s3 = ssub.s32 4, 1
    %v4 = vld [vmem:[%s0] sm:%s3]
    %5 = vst [vmem:[#allocation0] sm:%s3] %v4
    %v6 = vld [vmem:[#allocation0] sm:$0x3]
    %vm7 = vcmask 7168
    %8 = vst.msk [vmem:[%s1] ss:$4 sm:$0x3] %vm7, %v6
    %v9 = vld [vmem:[#allocation0] sm:$0x3]
    %10 = vrot.lane.b32.xlu0 %v9, 127
    %v11 = vpop.permute.xlu0 %10
    %vm12 = vcmask 7168
    %s13 = scalar_lea.vmem %s1, 1
    %14 = vst.msk [vmem:[%s13] ss:$4 sm:$0x3] %vm12, %v11
    %v15 = vld [vmem:[#allocation0] sm:$0x3]
    %16 = vrot.lane.b32.xlu0 %v15, 126
    %v17 = vpop.permute.xlu0 %16
    %vm18 = vcmask 7168
    %s19 = scalar_lea.vmem %s1, 2
    %20 = vst.msk [vmem:[%s19] ss:$4 sm:$0x3] %vm18, %v17
    %v21 = vld [vmem:[#allocation0] sm:$0x3]
    %22 = vrot.lane.b32.xlu0 %v21, 125
    %v23 = vpop.permute.xlu0 %22
    %vm24 = vcmask 7168
    %s25 = scalar_lea.vmem %s1, 3
    %26 = vst.msk [vmem:[%s25] ss:$4 sm:$0x3] %vm24, %v23

// kernel: basic_block.1
$region0: #{basic_block.1}
  #allocation0 [shape = 'u32[]', space=smem, size = 0x4, offset = 0x4, fixed_abs, tag = 'smem constant byte address 0x4 - core index']
  #allocation1 [shape = 'u32[72,128]{1,0:T(1,128)}', space=vmem, size = 0x9000, scoped, tag = 'internal scratch']
  %s0 = inlined_call_operand.vmem [shape: f32[16,256], index: 0, kind: input, shape index: {}]
  %s1 = inlined_call_operand.vmem [shape: f32[8,4], index: 1, kind: input, shape index: {}]
  %s2 = inlined_call_operand.vmem [shape: f32[8,72], index: 2, kind: input, shape index: {}]
  %s3 = inlined_call_operand.vmem [shape: f32[8,72], index: 3, kind: input, shape index: {}]
  %s4 = inlined_call_operand.vmem [shape: f32[9,256], index: 4, kind: input, shape index: {}]
  %s5 = inlined_call_operand.vmem [shape: f32[8,8], index: 5, kind: input, shape index: {}]
  %s6 = inlined_call_operand.vmem [shape: f32[16,256], index: 6, kind: output, shape index: {}]
  %s7 = sld [smem:[#allocation0]]
  $region57: #{basic_block.1} parent=0
    _
  %s9 = ssub.s32 1, %s7
  %s10 = scalar_select 0, %s9, %s7
  loop: start=0, step=1, limit=4
  $region2: #{basic_block.1} parent=0 // loop_pre_header
    _
  $region3: #{basic_block.1} parent=0 // loop_header
    %s12 = sphi 0, %s16
    %p13 = scmp.ge.s32.totalorder %s12, 4
    %s22 = sphi 0, %s24
    %s25 = sphi 0, %s22
    %s26 = sphi 0, %s25
    %s42 = sphi 0, %s26
    %s46 = sphi 0, %s46
    %s48 = sphi 0, %s46
    %s49 = sphi 0, %s48
    %s63 = sphi 0, %s49
    %s67 = sphi 0, %s67
    %s69 = sphi 0, %s67
    %s70 = sphi 0, %s69
    %s84 = sphi 0, %s70
    %s88 = sphi 0, %s88
    %s90 = sphi 0, %s88
    %s91 = sphi 0, %s90
    %s105 = sphi 0, %s91
    %s109 = sphi 0, %s109
    %s111 = sphi 0, %s109
    %s112 = sphi 0, %s111
    %s126 = sphi 0, %s112
    %s130 = sphi 0, %s130
    %s132 = sphi 0, %s130
    %s133 = sphi 0, %s132
    %s147 = sphi 0, %s133
    %s153 = sphi 0, %s155
    %s156 = sphi 0, %s153
    %s157 = sphi 0, %s156
    %s173 = sphi 0, %s157
  $region4: #{basic_block.1} parent=0 // loop_header_branch
    %15 = sbr.rel (%p13) target = $region8
  $region5: #{basic_block.1} parent=0 // loop_body
    %s17 = ssub.s32 %s12, 1
    %s18 = ssub.s32 %s12, 2
    %s19 = sadd.s32 %s12, 1
    %s20 = ssub.s32 %s12, %s19
    %p21 = scmp.eq.s32.totalorder %s20, 0
    %s23 = sadd.s32 %s22, 1
    %s24 = scalar_select %p21, %s22, %s23
    %p27 = pneg %p21
    %p28 = scmp.eq.s32.totalorder %s12, 1
    %p29 = por %p27, %p28
    %p30 = scmp.ne.s32.totalorder %s22, %s25
    %p31 = scmp.eq.s32.totalorder %s12, 0
    %p32 = por %p30, %p31
    %p33 = scmp.ne.s32.totalorder %s22, %s25
    %p34 = scmp.eq.s32.totalorder %s17, 1
    %p35 = por %p33, %p34
    %p36 = scmp.ne.s32.totalorder %s25, %s26
    %p37 = scmp.eq.s32.totalorder %s17, 0
    %p38 = por %p36, %p37
    %p39 = scmp.ne.s32.totalorder %s25, %s26
    %p40 = scmp.eq.s32.totalorder %s18, 1
    %p41 = por %p39, %p40
    %p43 = scmp.ne.s32.totalorder %s26, %s42
    %p44 = scmp.eq.s32.totalorder %s18, 0
    %p45 = por %p43, %p44
    %s47 = sadd.s32 %s46, 1
    %p50 = scmp.eq.s32.totalorder %s12, 1
    %p51 = scmp.ne.s32.totalorder %s46, %s48
    %p52 = scmp.eq.s32.totalorder %s12, 0
    %p53 = por %p51, %p52
    %p54 = scmp.ne.s32.totalorder %s46, %s48
    %p55 = scmp.eq.s32.totalorder %s17, 1
    %p56 = por %p54, %p55
    %p57 = scmp.ne.s32.totalorder %s48, %s49
    %p58 = scmp.eq.s32.totalorder %s17, 0
    %p59 = por %p57, %p58
    %p60 = scmp.ne.s32.totalorder %s48, %s49
    %p61 = scmp.eq.s32.totalorder %s18, 1
    %p62 = por %p60, %p61
    %p64 = scmp.ne.s32.totalorder %s49, %s63
    %p65 = scmp.eq.s32.totalorder %s18, 0
    %p66 = por %p64, %p65
    %s68 = sadd.s32 %s67, 1
    %p71 = scmp.eq.s32.totalorder %s12, 1
    %p72 = scmp.ne.s32.totalorder %s67, %s69
    %p73 = scmp.eq.s32.totalorder %s12, 0
    %p74 = por %p72, %p73
    %p75 = scmp.ne.s32.totalorder %s67, %s69
    %p76 = scmp.eq.s32.totalorder %s17, 1
    %p77 = por %p75, %p76
    %p78 = scmp.ne.s32.totalorder %s69, %s70
    %p79 = scmp.eq.s32.totalorder %s17, 0
    %p80 = por %p78, %p79
    %p81 = scmp.ne.s32.totalorder %s69, %s70
    %p82 = scmp.eq.s32.totalorder %s18, 1
    %p83 = por %p81, %p82
    %p85 = scmp.ne.s32.totalorder %s70, %s84
    %p86 = scmp.eq.s32.totalorder %s18, 0
    %p87 = por %p85, %p86
    %s89 = sadd.s32 %s88, 1
    %p92 = scmp.eq.s32.totalorder %s12, 1
    %p93 = scmp.ne.s32.totalorder %s88, %s90
    %p94 = scmp.eq.s32.totalorder %s12, 0
    %p95 = por %p93, %p94
    %p96 = scmp.ne.s32.totalorder %s88, %s90
    %p97 = scmp.eq.s32.totalorder %s17, 1
    %p98 = por %p96, %p97
    %p99 = scmp.ne.s32.totalorder %s90, %s91
    %p100 = scmp.eq.s32.totalorder %s17, 0
    %p101 = por %p99, %p100
    %p102 = scmp.ne.s32.totalorder %s90, %s91
    %p103 = scmp.eq.s32.totalorder %s18, 1
    %p104 = por %p102, %p103
    %p106 = scmp.ne.s32.totalorder %s91, %s105
    %p107 = scmp.eq.s32.totalorder %s18, 0
    %p108 = por %p106, %p107
    %s110 = sadd.s32 %s109, 1
    %p113 = scmp.eq.s32.totalorder %s12, 1
    %p114 = scmp.ne.s32.totalorder %s109, %s111
    %p115 = scmp.eq.s32.totalorder %s12, 0
    %p116 = por %p114, %p115
    %p117 = scmp.ne.s32.totalorder %s109, %s111
    %p118 = scmp.eq.s32.totalorder %s17, 1
    %p119 = por %p117, %p118
    %p120 = scmp.ne.s32.totalorder %s111, %s112
    %p121 = scmp.eq.s32.totalorder %s17, 0
    %p122 = por %p120, %p121
    %p123 = scmp.ne.s32.totalorder %s111, %s112
    %p124 = scmp.eq.s32.totalorder %s18, 1
    %p125 = por %p123, %p124
    %p127 = scmp.ne.s32.totalorder %s112, %s126
    %p128 = scmp.eq.s32.totalorder %s18, 0
    %p129 = por %p127, %p128
    %s131 = sadd.s32 %s130, 1
    %p134 = scmp.eq.s32.totalorder %s12, 1
    %p135 = scmp.ne.s32.totalorder %s130, %s132
    %p136 = scmp.eq.s32.totalorder %s12, 0
    %p137 = por %p135, %p136
    %p138 = scmp.ne.s32.totalorder %s130, %s132
    %p139 = scmp.eq.s32.totalorder %s17, 1
    %p140 = por %p138, %p139
    %p141 = scmp.ne.s32.totalorder %s132, %s133
    %p142 = scmp.eq.s32.totalorder %s17, 0
    %p143 = por %p141, %p142
    %p144 = scmp.ne.s32.totalorder %s132, %s133
    %p145 = scmp.eq.s32.totalorder %s18, 1
    %p146 = por %p144, %p145
    %p148 = scmp.ne.s32.totalorder %s133, %s147
    %p149 = scmp.eq.s32.totalorder %s18, 0
    %p150 = por %p148, %p149
    %s151 = ssub.s32 %s12, %s19
    %p152 = scmp.eq.s32.totalorder %s151, 0
    %s154 = sadd.s32 %s153, 1
    %s155 = scalar_select %p152, %s153, %s154
    %p158 = pneg %p152
    %p159 = scmp.eq.s32.totalorder %s12, 1
    %p160 = por %p158, %p159
    %p161 = scmp.ne.s32.totalorder %s153, %s156
    %p162 = scmp.eq.s32.totalorder %s12, 0
    %p163 = por %p161, %p162
    %p164 = scmp.ne.s32.totalorder %s153, %s156
    %p165 = scmp.eq.s32.totalorder %s17, 1
    %p166 = por %p164, %p165
    %p167 = scmp.ne.s32.totalorder %s156, %s157
    %p168 = scmp.eq.s32.totalorder %s17, 0
    %p169 = por %p167, %p168
    %p170 = scmp.ne.s32.totalorder %s156, %s157
    %p171 = scmp.eq.s32.totalorder %s18, 1
    %p172 = por %p170, %p171
    %p174 = scmp.ne.s32.totalorder %s157, %s173
    %p175 = scmp.eq.s32.totalorder %s18, 0
    %p176 = por %p174, %p175
    %p177 = scmp.le.s32.totalorder 1, %s12
    %p178 = scmp.lt.s32.totalorder %s12, 3
    %p179 = pnand %p177, %p178
    %p180 = pneg %p179
    // Predicated region
    $region9: #{basic_block.1} parent=5 // pred_check
      _
    $region10: #{basic_block.1} parent=5 // pred_check_branch
      %182 = sbr.rel (%p179) target = $region12
    $region11: #{basic_block.1} parent=5 // pred_region
      %s183 = ssub.s32 %s12, 1
      // Predicated region
      $region13: #{basic_block.1} parent=11 // pred_check
        %p184 = pneg %p59
      $region14: #{basic_block.1} parent=11 // pred_check_branch
        %186 = sbr.rel (%p184) target = $region16
      $region15: #{basic_block.1} parent=11 // pred_region
        _
      $region16: #{basic_block.1} parent=11 // pred_fallthru
        _
      // Predicated region
      $region17: #{basic_block.1} parent=11 // pred_check
        %p187 = pneg %p80
      $region18: #{basic_block.1} parent=11 // pred_check_branch
        %189 = sbr.rel (%p187) target = $region20
      $region19: #{basic_block.1} parent=11 // pred_region
        _
      $region20: #{basic_block.1} parent=11 // pred_fallthru
        _
      // Predicated region
      $region21: #{basic_block.1} parent=11 // pred_check
        %p190 = pneg %p101
      $region22: #{basic_block.1} parent=11 // pred_check_branch
        %192 = sbr.rel (%p190) target = $region24
      $region23: #{basic_block.1} parent=11 // pred_region
        _
      $region24: #{basic_block.1} parent=11 // pred_fallthru
        _
      // Predicated region
      $region25: #{basic_block.1} parent=11 // pred_check
        %p193 = pneg %p122
      $region26: #{basic_block.1} parent=11 // pred_check_branch
        %195 = sbr.rel (%p193) target = $region28
      $region27: #{basic_block.1} parent=11 // pred_region
        _
      $region28: #{basic_block.1} parent=11 // pred_fallthru
        _
      // Predicated region
      $region29: #{basic_block.1} parent=11 // pred_check
        %p196 = pneg %p143
      $region30: #{basic_block.1} parent=11 // pred_check_branch
        %198 = sbr.rel (%p196) target = $region32
      $region31: #{basic_block.1} parent=11 // pred_region
        _
      $region32: #{basic_block.1} parent=11 // pred_fallthru
        _
    $region12: #{basic_block.1} parent=5 // pred_fallthru
      _
    %p199 = scmp.lt.s32.totalorder %s12, 2
    // Predicated region
    $region33: #{basic_block.1} parent=5 // pred_check
      %p200 = pneg %p199
    $region34: #{basic_block.1} parent=5 // pred_check_branch
      %202 = sbr.rel (%p200) target = $region36
    $region35: #{basic_block.1} parent=5 // pred_region
      // Predicated region
      $region37: #{basic_block.1} parent=35 // pred_check
        %p203 = pneg %p32
      $region38: #{basic_block.1} parent=35 // pred_check_branch
        %205 = sbr.rel (%p203) target = $region40
      $region39: #{basic_block.1} parent=35 // pred_region
        %p206 = scmp.lt.s32.totalorder %s12, 1
        %s207 = scalar_select %p206, %s12, 1
        %s208 = smul.addr %s207, 2
        %s209 = smul.addr %s208, 8
        %s210 = scalar_lea.vmem %s0, %s209
      $region40: #{basic_block.1} parent=35 // pred_fallthru
        _
    $region36: #{basic_block.1} parent=5 // pred_fallthru
      _
    %p211 = scmp.le.s32.totalorder 1, %s12
    %p212 = scmp.lt.s32.totalorder %s12, 3
    %p213 = pnand %p211, %p212
    %p214 = pneg %p213
    // Predicated region
    $region41: #{basic_block.1} parent=5 // pred_check
      _
    $region42: #{basic_block.1} parent=5 // pred_check_branch
      %216 = sbr.rel (%p213) target = $region44
    $region43: #{basic_block.1} parent=5 // pred_region
      %s217 = ssub.s32 %s12, 1
      %p218 = scmp.lt.s32.totalorder %s17, 1
      %s219 = scalar_select %p218, %s17, 1
      %s220 = smul.addr %s219, 2
      %s221 = smul.addr %s220, 8
      %s222 = scalar_lea.vmem %s0, %s221
      %p223 = pneg %p38
      %p224 = pneg %p35
      %p225 = pneg %p59
      %p226 = pneg %p56
      %p227 = pneg %p80
      %p228 = pneg %p77
      %p229 = pneg %p101
      %p230 = pneg %p98
      %p231 = pneg %p122
      %p232 = pneg %p119
      %p233 = pneg %p143
      %p234 = pneg %p140
      %p235 = pneg %p169
      %p236 = pneg %p166
      %p237 = scmp.lt.s32.totalorder %s17, 1
      %s238 = scalar_select %p237, %s17, 1
      %s239 = smul.addr %s238, 2
      %s240 = smul.addr %s239, 8
      %s241 = scalar_lea.vmem %s6, %s240
      %p242 = scmp.lt.s32.totalorder %s17, 1
      %s243 = scalar_select %p242, %s17, 1
      %s244 = smul.addr %s243, 2
      %s245 = smul.addr %s244, 8
      %s246 = scalar_lea.vmem %s0, %s245
      %p247 = scmp.lt.s32.totalorder %s17, 1
      %s248 = scalar_select %p247, %s17, 1
      %s249 = smul.addr %s248, 2
      %s250 = smul.addr %s249, 8
      %s251 = scalar_lea.vmem %s6, %s250
      %v252 = vld [vmem:[%s246] sm:$0xff]
      %v253 = vld [vmem:[%s246 + $0x8] sm:$0xff]
      %v254 = vld [vmem:[%s1] sm:$0xff]
      %v255 = vld [vmem:[%s4] sm:$0xff]
      %v256 = vld [vmem:[%s4 + $0x8] sm:$0xff]
      %v257 = vld [vmem:[%s4 + $0x10] sm:$0x1]
      %v258 = vld [vmem:[%s4 + $0x18] sm:$0x1]
      %v259 = vld [vmem:[%s5] sm:$0xff]
      %vm260 = vcmask 64512
      %v262 = vsel %vm260, %v259, 0
      %264 = vmatpush.msra.mxu0 0.0
      %265 = vmatpush.msra.mxu0 0.0
      %266 = vmatpush.msra.mxu0 0.0
      %267 = vmatpush.msra.mxu0 0.0
      %268 = vmatpush.msra.mxu0 0.0
      %269 = vmatpush.msra.mxu0 0.0
      %270 = vmatpush.msra.mxu0 0.0
      %271 = vmatpush.msra.mxu0 0.0
      %272 = vmatpush.msra.mxu0 0.0
      %273 = vmatpush.msra.mxu0 0.0
      %274 = vmatpush.msra.mxu0 0.0
      %275 = vmatpush.msra.mxu0 0.0
      %276 = vmatpush.msra.mxu0 0.0
      %277 = vmatpush.msra.mxu0 0.0
      %278 = vmatpush.msra.mxu0 0.0
      %279 = vmatpush.msra.mxu0 %v252
      %280 = vmatmul.f32.gmra.mxu0 %v262
      %v281 = vpop.f32.mrf.mxu0
      %v282 = vadd.f32 0.0, %v281
      %283 = vdwg.mxu0
      %284 = vmatpush.msra.mxu0 0.0
      %285 = vmatpush.msra.mxu0 0.0
      %286 = vmatpush.msra.mxu0 0.0
      %287 = vmatpush.msra.mxu0 0.0
      %288 = vmatpush.msra.mxu0 0.0
      %289 = vmatpush.msra.mxu0 0.0
      %290 = vmatpush.msra.mxu0 0.0
      %291 = vmatpush.msra.mxu0 0.0
      %292 = vmatpush.msra.mxu0 0.0
      %293 = vmatpush.msra.mxu0 0.0
      %294 = vmatpush.msra.mxu0 0.0
      %295 = vmatpush.msra.mxu0 0.0
      %296 = vmatpush.msra.mxu0 0.0
      %297 = vmatpush.msra.mxu0 0.0
      %298 = vmatpush.msra.mxu0 0.0
      %299 = vmatpush.msra.mxu0 %v253
      %300 = vmatmul.f32.gmra.mxu0 %v262
      %v301 = vpop.f32.mrf.mxu0
      %v302 = vadd.f32 0.0, %v301
      %303 = vdwg.mxu0
      %v304 = vadd.f32 %v282, %v302
      %305 = vadd.xlane.f32.xlu0 %v304
      %v306 = vpop.xlane.xlu0 %305
      %v307 = vmul.f32 %v306, 0.00390625
      %v308 = vsub.f32 %v252, %v307
      %v309 = vsub.f32 %v253, %v307
      %v310 = vmul.f32 %v308, %v308
      %v311 = vmul.f32 %v309, %v309
      %312 = vmatpush.msra.mxu0 0.0
      %313 = vmatpush.msra.mxu0 0.0
      %314 = vmatpush.msra.mxu0 0.0
      %315 = vmatpush.msra.mxu0 0.0
      %316 = vmatpush.msra.mxu0 0.0
      %317 = vmatpush.msra.mxu0 0.0
      %318 = vmatpush.msra.mxu0 0.0
      %319 = vmatpush.msra.mxu0 0.0
      %320 = vmatpush.msra.mxu0 0.0
      %321 = vmatpush.msra.mxu0 0.0
      %322 = vmatpush.msra.mxu0 0.0
      %323 = vmatpush.msra.mxu0 0.0
      %324 = vmatpush.msra.mxu0 0.0
      %325 = vmatpush.msra.mxu0 0.0
      %326 = vmatpush.msra.mxu0 0.0
      %327 = vmatpush.msra.mxu0 %v310
      %328 = vmatmul.f32.gmra.mxu0 %v262
      %v329 = vpop.f32.mrf.mxu0
      %v330 = vadd.f32 0.0, %v329
      %331 = vdwg.mxu0
      %332 = vmatpush.msra.mxu0 0.0
      %333 = vmatpush.msra.mxu0 0.0
      %334 = vmatpush.msra.mxu0 0.0
      %335 = vmatpush.msra.mxu0 0.0
      %336 = vmatpush.msra.mxu0 0.0
      %337 = vmatpush.msra.mxu0 0.0
      %338 = vmatpush.msra.mxu0 0.0
      %339 = vmatpush.msra.mxu0 0.0
      %340 = vmatpush.msra.mxu0 0.0
      %341 = vmatpush.msra.mxu0 0.0
      %342 = vmatpush.msra.mxu0 0.0
      %343 = vmatpush.msra.mxu0 0.0
      %344 = vmatpush.msra.mxu0 0.0
      %345 = vmatpush.msra.mxu0 0.0
      %346 = vmatpush.msra.mxu0 0.0
      %347 = vmatpush.msra.mxu0 %v311
      %348 = vmatmul.f32.gmra.mxu0 %v262
      %v349 = vpop.f32.mrf.mxu0
      %v350 = vadd.f32 0.0, %v349
      %351 = vdwg.mxu0
      %v352 = vadd.f32 %v330, %v350
      %353 = vadd.xlane.f32.xlu0 %v352
      %v354 = vpop.xlane.xlu0 %353
      %v355 = vmul.f32 %v354, 0.00390625
      %v356 = vadd.f32 %v355, 1e-05
      %v357 = vrsqrt.pop %v356
      %v358 = vmul.f32 %v357, %v356
      %v359 = vmul.f32 %v358, %v357
      %v360 = vmul.f32 0.5, %v359
      %v361 = vsub.f32 1.5, %v360
      %v362 = vmul.f32 %v357, %v361
      %vm363 = vweird.f32 %v356
      %vm364 = vweird.f32 %v357
      %vm365 = vmor %vm363, %vm364
      %v366 = vsel %vm365, %v357, %v362
      %v367 = vmul.f32 %v308, %v366
      %v368 = vmul.f32 %v309, %v366
      %370 = vset.pattern.permute.xlu0 0
      %371 = vperm.xlu0 %370, %v254
      %v372 = vpop.permute.xlu0 %371
      %v374 = vmul.f32 %v367, %v372
      %v375 = vmul.f32 %v368, %v372
      %376 = vset.pattern.permute.xlu0 1
      %377 = vperm.xlu0 %376, %v254
      %v378 = vpop.permute.xlu0 %377
      %v380 = vadd.f32 %v374, %v378
      %v381 = vadd.f32 %v375, %v378
      %v382 = vmax.f32 %v380, 0.0
      %v383 = vmax.f32 %v381, 0.0
      %v384 = vld [vmem:[%s2] sm:$0xff]
      %385 = vrot.lane.b32.xlu0 %v382, 17
      %v386 = vpop.permute.xlu0 %385
      %387 = vrot.lane.b32.xlu0 %v383, 17
      %v388 = vpop.permute.xlu0 %387
      %v389 = vlaneseq
      %v390 = vand.u32 %v389, 127
      %vm391 = vcmp.lt.s32.totalorder %v390, 17
      %v392 = vsel %vm391, %v386, %v388
      %v393 = vsel %vm391, %v388, %v386
      %v394 = vperm.slane %v255, 0
      %v395 = vperm.slane %v256, 0
      %v396 = vmul.f32 %v393, %v394
      %v397 = vmul.f32 %v392, %v395
      %398 = vrot.lane.b32.xlu0 %v382, 16
      %v399 = vpop.permute.xlu0 %398
      %400 = vrot.lane.b32.xlu0 %v383, 16
      %v401 = vpop.permute.xlu0 %400
      %vm402 = vcmp.lt.s32.totalorder %v390, 16
      %v403 = vsel %vm402, %v399, %v401
      %v404 = vsel %vm402, %v401, %v399
      %v405 = vperm.slane %v255, 1
      %v406 = vperm.slane %v256, 1
      %v407 = vmul.f32 %v404, %v405
      %v408 = vmul.f32 %v403, %v406
      %409 = vrot.lane.b32.xlu0 %v382, 15
      %v410 = vpop.permute.xlu0 %409
      %411 = vrot.lane.b32.xlu0 %v383, 15
      %v412 = vpop.permute.xlu0 %411
      %vm413 = vcmp.lt.s32.totalorder %v390, 15
      %v414 = vsel %vm413, %v410, %v412
      %v415 = vsel %vm413, %v412, %v410
      %v416 = vperm.slane %v255, 2
      %v417 = vperm.slane %v256, 2
      %v418 = vmul.f32 %v415, %v416
      %v419 = vmul.f32 %v414, %v417
      %420 = vrot.lane.b32.xlu0 %v382, 1
      %v421 = vpop.permute.xlu0 %420
      %422 = vrot.lane.b32.xlu0 %v383, 1
      %v423 = vpop.permute.xlu0 %422
      %vm424 = vcmp.lt.s32.totalorder %v390, 1
      %v425 = vsel %vm424, %v421, %v423
      %v426 = vsel %vm424, %v423, %v421
      %v427 = vperm.slane %v255, 3
      %v428 = vperm.slane %v256, 3
      %v429 = vmul.f32 %v426, %v427
      %v430 = vmul.f32 %v425, %v428
      %431 = vrot.lane.b32.xlu0 %v382, 127
      %v432 = vpop.permute.xlu0 %431
      %433 = vrot.lane.b32.xlu0 %v383, 127
      %v434 = vpop.permute.xlu0 %433
      %vm435 = vcmp.lt.s32.totalorder %v390, 127
      %v436 = vsel %vm435, %v432, %v434
      %v437 = vsel %vm435, %v434, %v432
      %v438 = vperm.slane %v255, 5
      %v439 = vperm.slane %v256, 5
      %v440 = vmul.f32 %v436, %v438
      %v441 = vmul.f32 %v437, %v439
      %442 = vrot.lane.b32.xlu0 %v382, 113
      %v443 = vpop.permute.xlu0 %442
      %444 = vrot.lane.b32.xlu0 %v383, 113
      %v445 = vpop.permute.xlu0 %444
      %vm446 = vcmp.lt.s32.totalorder %v390, 113
      %v447 = vsel %vm446, %v443, %v445
      %v448 = vsel %vm446, %v445, %v443
      %v449 = vperm.slane %v255, 6
      %v450 = vperm.slane %v256, 6
      %v451 = vmul.f32 %v447, %v449
      %v452 = vmul.f32 %v448, %v450
      %453 = vrot.lane.b32.xlu0 %v382, 112
      %v454 = vpop.permute.xlu0 %453
      %455 = vrot.lane.b32.xlu0 %v383, 112
      %v456 = vpop.permute.xlu0 %455
      %vm457 = vcmp.lt.s32.totalorder %v390, 112
      %v458 = vsel %vm457, %v454, %v456
      %v459 = vsel %vm457, %v456, %v454
      %v460 = vperm.slane %v255, 7
      %v461 = vperm.slane %v256, 7
      %v462 = vmul.f32 %v458, %v460
      %v463 = vmul.f32 %v459, %v461
      %464 = vrot.lane.b32.xlu0 %v382, 111
      %v465 = vpop.permute.xlu0 %464
      %466 = vrot.lane.b32.xlu0 %v383, 111
      %v467 = vpop.permute.xlu0 %466
      %vm468 = vcmp.lt.s32.totalorder %v390, 111
      %v469 = vsel %vm468, %v465, %v467
      %v470 = vsel %vm468, %v467, %v465
      %v471 = vperm.slane %v257, 0
      %v472 = vperm.slane %v258, 0
      %v473 = vmul.f32 %v469, %v471
      %v474 = vmul.f32 %v470, %v472
      %vm475 = vcmask 588800
      %v477 = vsel %vm475, %v384, 0
      %479 = vmatpush.msra.mxu0 0.0
      %480 = vmatpush.msra.mxu0 0.0
      %481 = vmatpush.msra.mxu0 0.0
      %482 = vmatpush.msra.mxu0 0.0
      %483 = vmatpush.msra.mxu0 0.0
      %484 = vmatpush.msra.mxu0 0.0
      %485 = vmatpush.msra.mxu0 0.0
      %486 = vmatpush.msra.mxu0 %v473
      %487 = vmatpush.msra.mxu0 %v462
      %488 = vmatpush.msra.mxu0 %v451
      %489 = vmatpush.msra.mxu0 %v440
      %490 = vmatpush.msra.mxu0 %v382
      %491 = vmatpush.msra.mxu0 %v429
      %492 = vmatpush.msra.mxu0 %v418
      %493 = vmatpush.msra.mxu0 %v407
      %494 = vmatpush.msra.mxu0 %v396
      %495 = vmatmul.f32.gmra.mxu0 %v477
      %v496 = vpop.f32.mrf.mxu0
      %v497 = vadd.f32 0.0, %v496
      %498 = vdwg.mxu0
      %499 = vmatpush.msra.mxu0 0.0
      %500 = vmatpush.msra.mxu0 0.0
      %501 = vmatpush.msra.mxu0 0.0
      %502 = vmatpush.msra.mxu0 0.0
      %503 = vmatpush.msra.mxu0 0.0
      %504 = vmatpush.msra.mxu0 0.0
      %505 = vmatpush.msra.mxu0 0.0
      %506 = vmatpush.msra.mxu0 %v474
      %507 = vmatpush.msra.mxu0 %v463
      %508 = vmatpush.msra.mxu0 %v452
      %509 = vmatpush.msra.mxu0 %v441
      %510 = vmatpush.msra.mxu0 %v383
      %511 = vmatpush.msra.mxu0 %v430
      %512 = vmatpush.msra.mxu0 %v419
      %513 = vmatpush.msra.mxu0 %v408
      %514 = vmatpush.msra.mxu0 %v397
      %515 = vmatmul.f32.gmra.mxu0 %v477
      %v516 = vpop.f32.mrf.mxu0
      %v517 = vadd.f32 0.0, %v516
      %518 = vdwg.mxu0
      %519 = vmatpush.msra.mxu0 0.0
      %520 = vmatpush.msra.mxu0 0.0
      %521 = vmatpush.msra.mxu0 0.0
      %522 = vmatpush.msra.mxu0 0.0
      %523 = vmatpush.msra.mxu0 0.0
      %524 = vmatpush.msra.mxu0 0.0
      %525 = vmatpush.msra.mxu0 0.0
      %526 = vmatpush.msra.mxu0 0.0
      %527 = vmatpush.msra.mxu0 0.0
      %528 = vmatpush.msra.mxu0 0.0
      %529 = vmatpush.msra.mxu0 0.0
      %530 = vmatpush.msra.mxu0 0.0
      %531 = vmatpush.msra.mxu0 0.0
      %532 = vmatpush.msra.mxu0 0.0
      %533 = vmatpush.msra.mxu0 0.0
      %534 = vmatpush.msra.mxu0 %v497
      %535 = vmatmul.f32.gmra.mxu0 %v262
      %v536 = vpop.f32.mrf.mxu0
      %v537 = vadd.f32 0.0, %v536
      %538 = vdwg.mxu0
      %539 = vmatpush.msra.mxu0 0.0
      %540 = vmatpush.msra.mxu0 0.0
      %541 = vmatpush.msra.mxu0 0.0
      %542 = vmatpush.msra.mxu0 0.0
      %543 = vmatpush.msra.mxu0 0.0
      %544 = vmatpush.msra.mxu0 0.0
      %545 = vmatpush.msra.mxu0 0.0
      %546 = vmatpush.msra.mxu0 0.0
      %547 = vmatpush.msra.mxu0 0.0
      %548 = vmatpush.msra.mxu0 0.0
      %549 = vmatpush.msra.mxu0 0.0
      %550 = vmatpush.msra.mxu0 0.0
      %551 = vmatpush.msra.mxu0 0.0
      %552 = vmatpush.msra.mxu0 0.0
      %553 = vmatpush.msra.mxu0 0.0
      %554 = vmatpush.msra.mxu0 %v517
      %555 = vmatmul.f32.gmra.mxu0 %v262
      %v556 = vpop.f32.mrf.mxu0
      %v557 = vadd.f32 0.0, %v556
      %558 = vdwg.mxu0
      %v559 = vadd.f32 %v537, %v557
      %560 = vadd.xlane.f32.xlu0 %v559
      %v561 = vpop.xlane.xlu0 %560
      %v562 = vmul.f32 %v561, 0.00390625
      %v563 = vsub.f32 %v497, %v562
      %v564 = vsub.f32 %v517, %v562
      %v565 = vmul.f32 %v563, %v563
      %v566 = vmul.f32 %v564, %v564
      %567 = vmatpush.msra.mxu0 0.0
      %568 = vmatpush.msra.mxu0 0.0
      %569 = vmatpush.msra.mxu0 0.0
      %570 = vmatpush.msra.mxu0 0.0
      %571 = vmatpush.msra.mxu0 0.0
      %572 = vmatpush.msra.mxu0 0.0
      %573 = vmatpush.msra.mxu0 0.0
      %574 = vmatpush.msra.mxu0 0.0
      %575 = vmatpush.msra.mxu0 0.0
      %576 = vmatpush.msra.mxu0 0.0
      %577 = vmatpush.msra.mxu0 0.0
      %578 = vmatpush.msra.mxu0 0.0
      %579 = vmatpush.msra.mxu0 0.0
      %580 = vmatpush.msra.mxu0 0.0
      %581 = vmatpush.msra.mxu0 0.0
      %582 = vmatpush.msra.mxu0 %v565
      %583 = vmatmul.f32.gmra.mxu0 %v262
      %v584 = vpop.f32.mrf.mxu0
      %v585 = vadd.f32 0.0, %v584
      %586 = vdwg.mxu0
      %587 = vmatpush.msra.mxu0 0.0
      %588 = vmatpush.msra.mxu0 0.0
      %589 = vmatpush.msra.mxu0 0.0
      %590 = vmatpush.msra.mxu0 0.0
      %591 = vmatpush.msra.mxu0 0.0
      %592 = vmatpush.msra.mxu0 0.0
      %593 = vmatpush.msra.mxu0 0.0
      %594 = vmatpush.msra.mxu0 0.0
      %595 = vmatpush.msra.mxu0 0.0
      %596 = vmatpush.msra.mxu0 0.0
      %597 = vmatpush.msra.mxu0 0.0
      %598 = vmatpush.msra.mxu0 0.0
      %599 = vmatpush.msra.mxu0 0.0
      %600 = vmatpush.msra.mxu0 0.0
      %601 = vmatpush.msra.mxu0 0.0
      %602 = vmatpush.msra.mxu0 %v566
      %603 = vmatmul.f32.gmra.mxu0 %v262
      %v604 = vpop.f32.mrf.mxu0
      %v605 = vadd.f32 0.0, %v604
      %606 = vdwg.mxu0
      %v607 = vadd.f32 %v585, %v605
      %608 = vadd.xlane.f32.xlu0 %v607
      %v609 = vpop.xlane.xlu0 %608
      %v610 = vmul.f32 %v609, 0.00390625
      %v611 = vadd.f32 %v610, 1e-05
      %v612 = vrsqrt.pop %v611
      %v613 = vmul.f32 %v612, %v611
      %v614 = vmul.f32 %v613, %v612
      %v615 = vmul.f32 0.5, %v614
      %v616 = vsub.f32 1.5, %v615
      %v617 = vmul.f32 %v612, %v616
      %vm618 = vweird.f32 %v611
      %vm619 = vweird.f32 %v612
      %vm620 = vmor %vm618, %vm619
      %v621 = vsel %vm620, %v612, %v617
      %v622 = vmul.f32 %v563, %v621
      %v623 = vmul.f32 %v564, %v621
      %624 = vset.pattern.permute.xlu0 2
      %625 = vperm.xlu0 %624, %v254
      %v626 = vpop.permute.xlu0 %625
      %v628 = vmul.f32 %v622, %v626
      %v629 = vmul.f32 %v623, %v626
      %630 = vset.pattern.permute.xlu0 3
      %631 = vperm.xlu0 %630, %v254
      %v632 = vpop.permute.xlu0 %631
      %v634 = vadd.f32 %v628, %v632
      %v635 = vadd.f32 %v629, %v632
      %v636 = vmax.f32 %v634, 0.0
      %v637 = vmax.f32 %v635, 0.0
      %v638 = vld [vmem:[%s3] sm:$0xff]
      %639 = vrot.lane.b32.xlu0 %v636, 17
      %v640 = vpop.permute.xlu0 %639
      %641 = vrot.lane.b32.xlu0 %v637, 17
      %v642 = vpop.permute.xlu0 %641
      %v643 = vsel %vm391, %v640, %v642
      %v644 = vsel %vm391, %v642, %v640
      %v645 = vmul.f32 %v644, %v394
      %v646 = vmul.f32 %v643, %v395
      %647 = vrot.lane.b32.xlu0 %v636, 16
      %v648 = vpop.permute.xlu0 %647
      %649 = vrot.lane.b32.xlu0 %v637, 16
      %v650 = vpop.permute.xlu0 %649
      %v651 = vsel %vm402, %v648, %v650
      %v652 = vsel %vm402, %v650, %v648
      %v653 = vmul.f32 %v652, %v405
      %v654 = vmul.f32 %v651, %v406
      %655 = vrot.lane.b32.xlu0 %v636, 15
      %v656 = vpop.permute.xlu0 %655
      %657 = vrot.lane.b32.xlu0 %v637, 15
      %v658 = vpop.permute.xlu0 %657
      %v659 = vsel %vm413, %v656, %v658
      %v660 = vsel %vm413, %v658, %v656
      %v661 = vmul.f32 %v660, %v416
      %v662 = vmul.f32 %v659, %v417
      %663 = vrot.lane.b32.xlu0 %v636, 1
      %v664 = vpop.permute.xlu0 %663
      %665 = vrot.lane.b32.xlu0 %v637, 1
      %v666 = vpop.permute.xlu0 %665
      %v667 = vsel %vm424, %v664, %v666
      %v668 = vsel %vm424, %v666, %v664
      %v669 = vmul.f32 %v668, %v427
      %v670 = vmul.f32 %v667, %v428
      %671 = vrot.lane.b32.xlu0 %v636, 127
      %v672 = vpop.permute.xlu0 %671
      %673 = vrot.lane.b32.xlu0 %v637, 127
      %v674 = vpop.permute.xlu0 %673
      %v675 = vsel %vm435, %v672, %v674
      %v676 = vsel %vm435, %v674, %v672
      %v677 = vmul.f32 %v675, %v438
      %v678 = vmul.f32 %v676, %v439
      %679 = vrot.lane.b32.xlu0 %v636, 113
      %v680 = vpop.permute.xlu0 %679
      %681 = vrot.lane.b32.xlu0 %v637, 113
      %v682 = vpop.permute.xlu0 %681
      %v683 = vsel %vm446, %v680, %v682
      %v684 = vsel %vm446, %v682, %v680
      %v685 = vmul.f32 %v683, %v449
      %v686 = vmul.f32 %v684, %v450
      %687 = vrot.lane.b32.xlu0 %v636, 112
      %v688 = vpop.permute.xlu0 %687
      %689 = vrot.lane.b32.xlu0 %v637, 112
      %v690 = vpop.permute.xlu0 %689
      %v691 = vsel %vm457, %v688, %v690
      %v692 = vsel %vm457, %v690, %v688
      %v693 = vmul.f32 %v691, %v460
      %v694 = vmul.f32 %v692, %v461
      %695 = vrot.lane.b32.xlu0 %v636, 111
      %v696 = vpop.permute.xlu0 %695
      %697 = vrot.lane.b32.xlu0 %v637, 111
      %v698 = vpop.permute.xlu0 %697
      %v699 = vsel %vm468, %v696, %v698
      %v700 = vsel %vm468, %v698, %v696
      %v701 = vmul.f32 %v699, %v471
      %v702 = vmul.f32 %v700, %v472
      %v704 = vsel %vm475, %v638, 0
      %706 = vmatpush.msra.mxu0 0.0
      %707 = vmatpush.msra.mxu0 0.0
      %708 = vmatpush.msra.mxu0 0.0
      %709 = vmatpush.msra.mxu0 0.0
      %710 = vmatpush.msra.mxu0 0.0
      %711 = vmatpush.msra.mxu0 0.0
      %712 = vmatpush.msra.mxu0 0.0
      %713 = vmatpush.msra.mxu0 %v701
      %714 = vmatpush.msra.mxu0 %v693
      %715 = vmatpush.msra.mxu0 %v685
      %716 = vmatpush.msra.mxu0 %v677
      %717 = vmatpush.msra.mxu0 %v636
      %718 = vmatpush.msra.mxu0 %v669
      %719 = vmatpush.msra.mxu0 %v661
      %720 = vmatpush.msra.mxu0 %v653
      %721 = vmatpush.msra.mxu0 %v645
      %722 = vmatmul.f32.gmra.mxu0 %v704
      %v723 = vpop.f32.mrf.mxu0
      %v724 = vadd.f32 %v252, %v723
      %725 = vdwg.mxu0
      %726 = vmatpush.msra.mxu0 0.0
      %727 = vmatpush.msra.mxu0 0.0
      %728 = vmatpush.msra.mxu0 0.0
      %729 = vmatpush.msra.mxu0 0.0
      %730 = vmatpush.msra.mxu0 0.0
      %731 = vmatpush.msra.mxu0 0.0
      %732 = vmatpush.msra.mxu0 0.0
      %733 = vmatpush.msra.mxu0 %v702
      %734 = vmatpush.msra.mxu0 %v694
      %735 = vmatpush.msra.mxu0 %v686
      %736 = vmatpush.msra.mxu0 %v678
      %737 = vmatpush.msra.mxu0 %v637
      %738 = vmatpush.msra.mxu0 %v670
      %739 = vmatpush.msra.mxu0 %v662
      %740 = vmatpush.msra.mxu0 %v654
      %741 = vmatpush.msra.mxu0 %v646
      %742 = vmatmul.f32.gmra.mxu0 %v704
      %v743 = vpop.f32.mrf.mxu0
      %v744 = vadd.f32 %v253, %v743
      %745 = vdwg.mxu0
      %746 = vst [vmem:[%s251] sm:$0xff] %v724
      %747 = vst [vmem:[%s251 + $0x8] sm:$0xff] %v744
      %p748 = scmp.lt.s32.totalorder %s17, 1
      %s749 = scalar_select %p748, %s17, 1
      %s750 = smul.addr %s749, 2
      %s751 = smul.addr %s750, 8
      %s752 = scalar_lea.vmem %s6, %s751
      // Predicated region
      $region45: #{basic_block.1} parent=43 // pred_check
        %p753 = pneg %p166
      $region46: #{basic_block.1} parent=43 // pred_check_branch
        %755 = sbr.rel (%p753) target = $region48
      $region47: #{basic_block.1} parent=43 // pred_region
        _
      $region48: #{basic_block.1} parent=43 // pred_fallthru
        _
    $region44: #{basic_block.1} parent=5 // pred_fallthru
      _
    %p756 = scmp.le.s32.totalorder 2, %s12
    // Predicated region
    $region49: #{basic_block.1} parent=5 // pred_check
      %p757 = pneg %p756
    $region50: #{basic_block.1} parent=5 // pred_check_branch
      %759 = sbr.rel (%p757) target = $region52
    $region51: #{basic_block.1} parent=5 // pred_region
      %s760 = ssub.s32 %s12, 2
      // Predicated region
      $region53: #{basic_block.1} parent=51 // pred_check
        %p761 = pneg %p172
      $region54: #{basic_block.1} parent=51 // pred_check_branch
        %763 = sbr.rel (%p761) target = $region56
      $region55: #{basic_block.1} parent=51 // pred_region
        %p764 = scmp.lt.s32.totalorder %s18, 1
        %s765 = scalar_select %p764, %s18, 1
        %s766 = smul.addr %s765, 2
        %s767 = smul.addr %s766, 8
        %s768 = scalar_lea.vmem %s6, %s767
      $region56: #{basic_block.1} parent=51 // pred_fallthru
        _
    $region52: #{basic_block.1} parent=5 // pred_fallthru
      _
  $region6: #{basic_block.1} parent=0 // loop_footer
    %s16 = sadd.s32 1, %s12
  $region7: #{basic_block.1} parent=0 // loop_footer_branch
    %11 = sbr.rel target = $region3
  $region8: #{basic_block.1} parent=0 // loop_exit
    _

</llo_original>
